<compile_context>
chip_gen: v6e
topology: v6e:2x2x1
jax: 0.10.0
libtpu: 0.0.40
codegen_flags: <defaults>
</compile_context>

<pallas_src>
import functools

import jax
import jax.numpy as jnp
from jax.experimental import pallas as pl
from jax.experimental.pallas import tpu as pltpu


def _round_up(n, m):
    return ((n + m - 1) // m) * m


def _vmem_limit_bytes():
    """Generation-aware scoped-VMEM limit: ~85% of per-core capacity.

    v5e/v6e: 128 MiB -> ~109 MiB; v7x: 64 MiB -> ~54 MiB.  The 15% headroom is
    left for Mosaic internal scratch so the compiler is not forced to spill.
    """
    try:
        cap = int(pltpu.get_tpu_info().vmem_capacity_bytes)
    except Exception:
        cap = 64 << 20  # conservative fallback (v7x per-core figure)
    return int(cap * 0.85)


# ---------------------------------------------------------------------------
# Kernel 1: resident-weight path (weight fits in VMEM, 1-D row grid).
# ---------------------------------------------------------------------------
def _skip_ln_kernel(x_ref, wt_ref, b_ref, g_ref, beta_ref, o_ref, *, eps, hidden):
    # x_ref:    (TM, Hp)  row tile of the flattened (zero-padded) input
    # wt_ref:   (Hp, Hp)  Linear weight PRE-TRANSPOSED to (in, out): the
    #                     contraction is rhs dim 0, so no in-kernel transpose.
    # b/g/beta: (1, Hp)   bias / gamma / beta (padded lanes are zero)
    # hidden:   true (unpadded) hidden width H.
    x = x_ref[...]
    wt = wt_ref[...]
    x_mm = x if x.dtype == wt.dtype else x.astype(wt.dtype)
    h = jnp.dot(x_mm, wt, preferred_element_type=jnp.float32)

    # Skip connection + bias, f32 for the normalization math.
    r = x.astype(jnp.float32) + h + b_ref[...].astype(jnp.float32)

    # LayerNorm over the true hidden width (padded lanes are exactly zero, so
    # sums over Hp equal sums over H).
    inv_h = jnp.float32(1.0 / hidden)
    s1 = jnp.sum(r, axis=-1, keepdims=True)
    s2 = jnp.sum(r * r, axis=-1, keepdims=True)
    mean = s1 * inv_h
    var = jnp.maximum(s2 * inv_h - mean * mean, 0.0)
    inv = jax.lax.rsqrt(var + eps)

    y = (r - mean) * inv * g_ref[...].astype(jnp.float32) \
        + beta_ref[...].astype(jnp.float32)
    o_ref[...] = y.astype(o_ref.dtype)


# ---------------------------------------------------------------------------
# Kernel 2: K-tiled fallback (weight streamed over the contraction dim).
# Grid = (row_tiles, K_tiles); K axis is "arbitrary" (reduction, innermost).
# ---------------------------------------------------------------------------
def _skip_ln_ktiled_kernel(x_ref, wt_ref, b_ref, g_ref, beta_ref, o_ref,
                           acc_ref, *, eps, hidden, tk):
    # x_ref:   (TM, tk)  K-slice of the row tile
    # wt_ref:  (tk, Hp)  K-slice of the pre-transposed weight
    # acc_ref: (TM, Hp)  f32 accumulator scratch (persists across K steps)
    k = pl.program_id(1)
    nk = pl.num_programs(1)

    @pl.when(k == 0)
    def _init():
        acc_ref[...] = jnp.zeros_like(acc_ref)

    x = x_ref[...]
    wt = wt_ref[...]
    x_mm = x if x.dtype == wt.dtype else x.astype(wt.dtype)
    acc_ref[...] += jnp.dot(x_mm, wt, preferred_element_type=jnp.float32)

    # Residual: the Linear is square (H -> H), so this K-slice of x lands on
    # the matching output columns.  tk is a multiple of 128 -> aligned slice.
    col = pl.multiple_of(k * tk, 128)
    acc_ref[:, pl.ds(col, tk)] += x.astype(jnp.float32)

    @pl.when(k == nk - 1)
    def _finalize():
        r = acc_ref[...] + b_ref[...].astype(jnp.float32)
        inv_h = jnp.float32(1.0 / hidden)
        s1 = jnp.sum(r, axis=-1, keepdims=True)
        s2 = jnp.sum(r * r, axis=-1, keepdims=True)
        mean = s1 * inv_h
        var = jnp.maximum(s2 * inv_h - mean * mean, 0.0)
        inv = jax.lax.rsqrt(var + eps)
        y = (r - mean) * inv * g_ref[...].astype(jnp.float32) \
            + beta_ref[...].astype(jnp.float32)
        o_ref[...] = y.astype(o_ref.dtype)


# ---------------------------------------------------------------------------
# Wrapper
# ---------------------------------------------------------------------------
def skip_connection_forward(x, w, b, gamma, beta, *, eps=1e-5, tile_rows=512):
    """y = LayerNorm(x + x @ w.T + b);  x: (B, S, H), w: (H, H) in (out, in)."""
    B, S, H = x.shape
    rows = B * S

    # Lane-dense hidden width (multiple of 128). Zero padding is exact here:
    # padded lanes of x / w / b / gamma / beta are zero -> padded r is zero ->
    # sums / variance unaffected; padded outputs are zero and sliced off.
    Hp = _round_up(H, 128)

    x_dtype = x.dtype
    mm_dtype = jnp.promote_types(x.dtype, w.dtype)   # never downcast f32 x
    x_bytes = jnp.dtype(x_dtype).itemsize
    mm_bytes = jnp.dtype(mm_dtype).itemsize

    limit_bytes = _vmem_limit_bytes()

    # ---- operand prep (one-time HBM-side work; fuses with the pads) --------
    x2 = x.reshape(rows, H)
    wt = jnp.transpose(w)                      # (in, out): contract on rhs dim 0
    if Hp != H:
        wt = jnp.pad(wt, ((0, Hp - H), (0, Hp - H)))
        b_p = jnp.pad(b, (0, Hp - H))
        g_p = jnp.pad(gamma, (0, Hp - H))
        be_p = jnp.pad(beta, (0, Hp - H))
    else:
        b_p, g_p, be_p = b, gamma, beta
    wt = wt.astype(mm_dtype)
    b2 = b_p.reshape(1, Hp)
    g2 = g_p.reshape(1, Hp)
    be2 = be_p.reshape(1, Hp)

    # ---- row-tile sizing ----------------------------------------------------
    rows8 = _round_up(rows, 8)
    tm = min(_round_up(tile_rows, 8), rows8)
    floor_tm = min(256, rows8)                  # MXU-height floor

    def _budget_resident(tm_):
        return (3 * tm_ * Hp * x_bytes          # x tile   (up to Buffered(3))
                + 2 * tm_ * Hp * x_bytes        # out tile (double buffered)
                + Hp * Hp * mm_bytes            # resident weight, Buffered(1)
                + 3 * 8 * Hp * 4)               # b/gamma/beta, sublane-padded

    while tm > floor_tm and _budget_resident(tm) > limit_bytes:
        tm = max(_round_up(tm // 2, 8), floor_tm)
    use_resident = _budget_resident(tm) <= limit_bytes

    if use_resident:
        rows_p = _round_up(rows, tm)
        x2p = (jnp.pad(x2, ((0, rows_p - rows), (0, Hp - H)))
               if (rows_p != rows or Hp != H) else x2)
        n_tiles = rows_p // tm                  # parallel axis; on v7x this is
                                                # what shards across the 2 TCs
        x_buf = 3 if n_tiles >= 3 else 2

        kernel = functools.partial(_skip_ln_kernel, eps=eps, hidden=H)
        cost = pl.CostEstimate(
            flops=2 * rows_p * Hp * Hp + 10 * rows_p * Hp,
            transcendentals=rows_p,
            bytes_accessed=(rows_p * Hp * 2 * x_bytes
                            + Hp * Hp * mm_bytes + 3 * Hp * 4),
        )
        out = pl.pallas_call(
            kernel,
            out_shape=jax.ShapeDtypeStruct((rows_p, Hp), x_dtype),
            grid_spec=pltpu.PrefetchScalarGridSpec(
                num_scalar_prefetch=0,
                grid=(n_tiles,),
                in_specs=[
                    pl.BlockSpec((tm, Hp), lambda i: (i, 0),
                                 pipeline_mode=pl.Buffered(x_buf)),   # x rows
                    pl.BlockSpec((Hp, Hp), lambda i: (0, 0),
                                 pipeline_mode=pl.Buffered(1)),       # weight
                    pl.BlockSpec((1, Hp), lambda i: (0, 0),
                                 pipeline_mode=pl.Buffered(1)),       # bias
                    pl.BlockSpec((1, Hp), lambda i: (0, 0),
                                 pipeline_mode=pl.Buffered(1)),       # gamma
                    pl.BlockSpec((1, Hp), lambda i: (0, 0),
                                 pipeline_mode=pl.Buffered(1)),       # beta
                ],
                out_specs=pl.BlockSpec((tm, Hp), lambda i: (i, 0)),
            ),
            compiler_params=pltpu.CompilerParams(
                dimension_semantics=("parallel",),
                vmem_limit_bytes=limit_bytes,
            ),
            cost_estimate=cost,
        )(x2p, wt, b2, g2, be2)
        return out[:rows, :H].reshape(B, S, H)

    # ---- K-tiled fallback: weight too large to keep resident ----------------
    tm = floor_tm

    def _budget_ktiled(tm_, tk_):
        return (2 * tm_ * tk_ * x_bytes         # x K-slice (double buffered)
                + 2 * tk_ * Hp * mm_bytes       # weight K-slice (double buf.)
                + tm_ * Hp * 4                  # f32 accumulator scratch
                + 2 * tm_ * Hp * x_bytes        # out tile
                + 3 * 8 * Hp * 4)               # vectors

    tk = None
    for cand in (1024, 512, 256, 128):
        if Hp % cand == 0 and _budget_ktiled(tm, cand) <= limit_bytes:
            tk = cand
            break
    if tk is None:
        tk = 128
        while tm > 8 and _budget_ktiled(tm, tk) > limit_bytes:
            tm = max(_round_up(tm // 2, 8), 8)
        if _budget_ktiled(tm, tk) > limit_bytes:
            raise ValueError(
                "SkipConnection Pallas kernel: hidden width too large for VMEM "
                f"(H={H}, Hp={Hp}, limit={limit_bytes} bytes)")

    rows_p = _round_up(rows, tm)
    x2p = (jnp.pad(x2, ((0, rows_p - rows), (0, Hp - H)))
           if (rows_p != rows or Hp != H) else x2)
    n_row_tiles = rows_p // tm
    nk = Hp // tk

    kernel = functools.partial(_skip_ln_ktiled_kernel, eps=eps, hidden=H, tk=tk)
    cost = pl.CostEstimate(
        flops=2 * rows_p * Hp * Hp + 10 * rows_p * Hp,
        transcendentals=rows_p,
        bytes_accessed=(rows_p * Hp * 2 * x_bytes
                        + n_row_tiles * Hp * Hp * mm_bytes + 3 * Hp * 4),
    )
    out = pl.pallas_call(
        kernel,
        out_shape=jax.ShapeDtypeStruct((rows_p, Hp), x_dtype),
        grid_spec=pltpu.PrefetchScalarGridSpec(
            num_scalar_prefetch=0,
            grid=(n_row_tiles, nk),
            in_specs=[
                pl.BlockSpec((tm, tk), lambda i, k: (i, k)),          # x slice
                pl.BlockSpec((tk, Hp), lambda i, k: (k, 0)),          # w slice
                pl.BlockSpec((1, Hp), lambda i, k: (0, 0),
                             pipeline_mode=pl.Buffered(1)),           # bias
                pl.BlockSpec((1, Hp), lambda i, k: (0, 0),
                             pipeline_mode=pl.Buffered(1)),           # gamma
                pl.BlockSpec((1, Hp), lambda i, k: (0, 0),
                             pipeline_mode=pl.Buffered(1)),           # beta
            ],
            out_specs=pl.BlockSpec((tm, Hp), lambda i, k: (i, 0)),
            scratch_shapes=[pltpu.VMEM((tm, Hp), jnp.float32)],
        ),
        compiler_params=pltpu.CompilerParams(
            dimension_semantics=("parallel", "arbitrary"),
            vmem_limit_bytes=limit_bytes,
        ),
        cost_estimate=cost,
    )(x2p, wt, b2, g2, be2)
    return out[:rows, :H].reshape(B, S, H)


# ---------------------------------------------------------------------------
# Pure-JAX reference
# ---------------------------------------------------------------------------
def _reference(x, w, b, gamma, beta, eps=1e-5):
    h = jnp.einsum("bsh,oh->bso", x, w) + b
    r = x + h
    mean = jnp.mean(r, axis=-1, keepdims=True)
    var = jnp.mean((r - mean) ** 2, axis=-1, keepdims=True)
    return (r - mean) * jax.lax.rsqrt(var + eps) * gamma + beta


if __name__ == "__main__":
    key = jax.random.PRNGKey(0)
    B, S, H = 2, 8, 32

    kx, kw, kb = jax.random.split(key, 3)
    x = jax.random.normal(kx, (B, S, H), dtype=jnp.float32)
    # Deterministic synthetic parameters (shapes of nn.Linear(H,H) / nn.LayerNorm(H)).
    w = jax.random.normal(kw, (H, H), dtype=jnp.float32) * (1.0 / jnp.sqrt(H))
    b = jax.random.normal(kb, (H,), dtype=jnp.float32) * 0.01
    gamma = jnp.ones((H,), dtype=jnp.float32)
    beta = jnp.zeros((H,), dtype=jnp.float32)

    y = skip_connection_forward(x, w, b, gamma, beta)
    y = jax.block_until_ready(y)

    y_ref = _reference(x, w, b, gamma, beta)
    assert jnp.allclose(y, y_ref, atol=1e-4, rtol=1e-4), "mismatch vs reference"

    print("KERNEL_OK")
</pallas_src>

<mosaic_0001>
module attributes {stable_mosaic.version = 11 : i64} {
  func.func @_skip_ln_kernel(%arg0: i32, %arg1: memref<16x128xf32, #tpu.memory_space<vmem>>, %arg2: memref<128x128xf32, #tpu.memory_space<vmem>>, %arg3: memref<1x128xf32, #tpu.memory_space<vmem>>, %arg4: memref<1x128xf32, #tpu.memory_space<vmem>>, %arg5: memref<1x128xf32, #tpu.memory_space<vmem>>, %arg6: memref<16x128xf32, #tpu.memory_space<vmem>>) attributes {dimension_semantics = [#tpu.dimension_semantics<parallel>], iteration_bounds = array<i64: 1>, scalar_prefetch = 0 : i64, scratch_operands = 0 : i64, tpu.core_type = #tpu.core_type<tc>, window_params = [{pipeline_mode = #tpu.pipeline_mode<double_buffered>, transform_indices = @transform_0, window_bounds = array<i64: 16, 128>}, {pipeline_mode = #tpu.pipeline_mode<synchronous>, transform_indices = @transform_1, window_bounds = array<i64: 128, 128>}, {pipeline_mode = #tpu.pipeline_mode<synchronous>, transform_indices = @transform_2, window_bounds = array<i64: 1, 128>}, {pipeline_mode = #tpu.pipeline_mode<synchronous>, transform_indices = @transform_3, window_bounds = array<i64: 1, 128>}, {pipeline_mode = #tpu.pipeline_mode<synchronous>, transform_indices = @transform_4, window_bounds = array<i64: 1, 128>}, {transform_indices = @transform_5, window_bounds = array<i64: 16, 128>}]} {
    %c0 = arith.constant 0 : index
    %c0_0 = arith.constant 0 : index
    %0 = vector.load %arg1[%c0, %c0_0] : memref<16x128xf32, #tpu.memory_space<vmem>>, vector<16x128xf32>
    %c0_1 = arith.constant 0 : index
    %c0_2 = arith.constant 0 : index
    %1 = vector.load %arg2[%c0_1, %c0_2] : memref<128x128xf32, #tpu.memory_space<vmem>>, vector<128x128xf32>
    %cst = arith.constant dense<0.000000e+00> : vector<16x128xf32>
    %2 = tpu.matmul %0, %1, %cst {dimension_numbers = #tpu.dot_dimension_numbers<[1], [0], [0], [1], [0, 0, 1, 1], [], []>} : vector<16x128xf32>, vector<128x128xf32>, vector<16x128xf32> -> vector<16x128xf32>
    %3 = arith.addf %0, %2 : vector<16x128xf32>
    %c0_3 = arith.constant 0 : index
    %c0_4 = arith.constant 0 : index
    %4 = vector.load %arg3[%c0_3, %c0_4] : memref<1x128xf32, #tpu.memory_space<vmem>>, vector<1x128xf32>
    %5 = vector.broadcast %4 : vector<1x128xf32> to vector<16x128xf32>
    %6 = arith.addf %3, %5 : vector<16x128xf32>
    %cst_5 = arith.constant dense<0.000000e+00> : vector<16xf32>
    %7 = vector.multi_reduction <add>, %6, %cst_5 [1] : vector<16x128xf32> to vector<16xf32>
    %8 = vector.shape_cast %7 : vector<16xf32> to vector<16x1xf32>
    %9 = arith.mulf %6, %6 : vector<16x128xf32>
    %cst_6 = arith.constant dense<0.000000e+00> : vector<16xf32>
    %10 = vector.multi_reduction <add>, %9, %cst_6 [1] : vector<16x128xf32> to vector<16xf32>
    %11 = vector.shape_cast %10 : vector<16xf32> to vector<16x1xf32>
    %cst_7 = arith.constant 3.125000e-02 : f32
    %12 = vector.broadcast %cst_7 : f32 to vector<16x1xf32>
    %13 = arith.mulf %8, %12 : vector<16x1xf32>
    %cst_8 = arith.constant 3.125000e-02 : f32
    %14 = vector.broadcast %cst_8 : f32 to vector<16x1xf32>
    %15 = arith.mulf %11, %14 : vector<16x1xf32>
    %16 = arith.mulf %13, %13 : vector<16x1xf32>
    %17 = arith.subf %15, %16 : vector<16x1xf32>
    %cst_9 = arith.constant 0.000000e+00 : f32
    %18 = vector.broadcast %cst_9 : f32 to vector<16x1xf32>
    %19 = arith.maximumf %17, %18 : vector<16x1xf32>
    %cst_10 = arith.constant 9.99999974E-6 : f32
    %20 = vector.broadcast %cst_10 : f32 to vector<16x1xf32>
    %21 = arith.addf %19, %20 : vector<16x1xf32>
    %22 = math.rsqrt %21 : vector<16x1xf32>
    %23 = vector.broadcast %13 : vector<16x1xf32> to vector<16x128xf32>
    %24 = arith.subf %6, %23 : vector<16x128xf32>
    %25 = vector.broadcast %22 : vector<16x1xf32> to vector<16x128xf32>
    %26 = arith.mulf %24, %25 : vector<16x128xf32>
    %c0_11 = arith.constant 0 : index
    %c0_12 = arith.constant 0 : index
    %27 = vector.load %arg4[%c0_11, %c0_12] : memref<1x128xf32, #tpu.memory_space<vmem>>, vector<1x128xf32>
    %28 = vector.broadcast %27 : vector<1x128xf32> to vector<16x128xf32>
    %29 = arith.mulf %26, %28 : vector<16x128xf32>
    %c0_13 = arith.constant 0 : index
    %c0_14 = arith.constant 0 : index
    %30 = vector.load %arg5[%c0_13, %c0_14] : memref<1x128xf32, #tpu.memory_space<vmem>>, vector<1x128xf32>
    %31 = vector.broadcast %30 : vector<1x128xf32> to vector<16x128xf32>
    %32 = arith.addf %29, %31 : vector<16x128xf32>
    %c0_15 = arith.constant 0 : index
    %c0_16 = arith.constant 0 : index
    %33 = vector.load %arg6[%c0_15, %c0_16] : memref<16x128xf32, #tpu.memory_space<vmem>>, vector<16x128xf32>
    tpu.vector_store %arg6[%c0_15, %c0_16], %32 {strides = array<i32>} : memref<16x128xf32, #tpu.memory_space<vmem>>, vector<16x128xf32>,
    return
  }
  func.func @transform_0(%arg0: i32) -> (i32, i32) {
    %c0_i32 = arith.constant 0 : i32
    %c0_i32_0 = arith.constant 0 : i32
    return %arg0, %c0_i32 : i32, i32
  }
  func.func @transform_1(%arg0: i32) -> (i32, i32) {
    %c0_i32 = arith.constant 0 : i32
    %c0_i32_0 = arith.constant 0 : i32
    %c0_i32_1 = arith.constant 0 : i32
    return %c0_i32, %c0_i32_0 : i32, i32
  }
  func.func @transform_2(%arg0: i32) -> (i32, i32) {
    %c0_i32 = arith.constant 0 : i32
    %c0_i32_0 = arith.constant 0 : i32
    %c0_i32_1 = arith.constant 0 : i32
    return %c0_i32, %c0_i32_0 : i32, i32
  }
  func.func @transform_3(%arg0: i32) -> (i32, i32) {
    %c0_i32 = arith.constant 0 : i32
    %c0_i32_0 = arith.constant 0 : i32
    %c0_i32_1 = arith.constant 0 : i32
    return %c0_i32, %c0_i32_0 : i32, i32
  }
  func.func @transform_4(%arg0: i32) -> (i32, i32) {
    %c0_i32 = arith.constant 0 : i32
    %c0_i32_0 = arith.constant 0 : i32
    %c0_i32_1 = arith.constant 0 : i32
    return %c0_i32, %c0_i32_0 : i32, i32
  }
  func.func @transform_5(%arg0: i32) -> (i32, i32) {
    %c0_i32 = arith.constant 0 : i32
    %c0_i32_0 = arith.constant 0 : i32
    return %arg0, %c0_i32 : i32, i32
  }
}

</mosaic_0001>

<llo_original>
// kernel: tpu_custom_call.1
$region0: #{tpu_custom_call.1}
  #allocation0 [shape = 'u32[]', space=smem, size = 0x4, offset = 0x4, fixed_abs, tag = 'smem constant byte address 0x4 - core index']
  #allocation1 [shape = 'u32[144,128]{1,0:T(1,128)}', space=vmem, size = 0x12000, scoped, tag = 'internal scratch']
  %s0 = inlined_call_operand.hbm [shape: f32[16,128], index: 0, kind: input, shape index: {}]
  %s1 = inlined_call_operand.hbm [shape: f32[128,128], index: 1, kind: input, shape index: {}]
  %s2 = inlined_call_operand.vmem [shape: f32[1,128], index: 2, kind: input, shape index: {}]
  %s3 = inlined_call_operand.vmem [shape: f32[1,128], index: 3, kind: input, shape index: {}]
  %s4 = inlined_call_operand.vmem [shape: f32[1,128], index: 4, kind: input, shape index: {}]
  %s5 = inlined_call_operand.hbm [shape: f32[16,128], index: 5, kind: output, shape index: {}]
  %s6 = sld [smem:[#allocation0]]
  $region38: #{tpu_custom_call.1} parent=0
    _
  %s8 = ssub.s32 1, %s6
  %s9 = scalar_select 0, %s8, %s6
  $region1: #{tpu_custom_call.1} parent=0
    #allocation2 [shape = 'u8[8192]{0}', space=vmem, size = 0x2000, scoped, tag = 'input window, operand 0, single buffered']
    #allocation3 [shape = 's32[1]{0}', space=sflag, size = 0x4, scoped, tag = 'scoped memory for tpu_custom_call.1']
    #allocation4 [shape = 's32[1]{0}', space=sflag, size = 0x4, scoped, tag = 'scoped memory for tpu_custom_call.1']
    #allocation5 [shape = 'u8[65536]{0}', space=vmem, size = 0x10000, scoped, tag = 'input window, operand 1, single buffered']
    #allocation6 [shape = 's32[1]{0}', space=sflag, size = 0x4, scoped, tag = 'scoped memory for tpu_custom_call.1']
    #allocation7 [shape = 'u8[8192]{0}', space=vmem, size = 0x2000, scoped, tag = 'output window, operand 0, single buffered']
    %10 = vsyncpa [#allocation3], 0
    %11 = vsyncpa [#allocation6], 0
    %12 = vsyncpa [#allocation4], 0
    // Predicated region
    $region2: #{tpu_custom_call.1} parent=1 // pred_check
      _
    $region3: #{tpu_custom_call.1} parent=1 // pred_check_branch
      %14 = sbr.rel (0) target = $region5
    $region4: #{tpu_custom_call.1} parent=1 // pred_region
      %s16 = ssub.s32 256, 256
      %17 = vsyncadd [#allocation3], %s16
      %s18 = sshll.u32 [#allocation2], 4
      %s19 = int_to_ptr.vmem [resolvable:$true] %s18
      %24 = dma.hbm_to_vmem [thread:$0]  %s0, 256, %s19, [#allocation3], 128, 128, 8
    $region5: #{tpu_custom_call.1} parent=1 // pred_fallthru
      _
    // Predicated region
    $region6: #{tpu_custom_call.1} parent=1 // pred_check
      _
    $region7: #{tpu_custom_call.1} parent=1 // pred_check_branch
      %26 = sbr.rel (0) target = $region9
    $region8: #{tpu_custom_call.1} parent=1 // pred_region
      %s28 = ssub.s32 2048, 2048
      %29 = vsyncadd [#allocation6], %s28
      %s30 = sshll.u32 [#allocation5], 4
      %s31 = int_to_ptr.vmem [resolvable:$true] %s30
      %36 = dma.hbm_to_vmem [thread:$0]  %s1, 2048, %s31, [#allocation6], 128, 128, 8
    $region9: #{tpu_custom_call.1} parent=1 // pred_fallthru
      _
    // Predicated region
    $region10: #{tpu_custom_call.1} parent=1 // pred_check
      _
    $region11: #{tpu_custom_call.1} parent=1 // pred_check_branch
      %38 = sbr.rel (0) target = $region13
    $region12: #{tpu_custom_call.1} parent=1 // pred_region
      _
    $region13: #{tpu_custom_call.1} parent=1 // pred_fallthru
      _
    // Predicated region
    $region14: #{tpu_custom_call.1} parent=1 // pred_check
      _
    $region15: #{tpu_custom_call.1} parent=1 // pred_check_branch
      %40 = sbr.rel (0) target = $region17
    $region16: #{tpu_custom_call.1} parent=1 // pred_region
      _
    $region17: #{tpu_custom_call.1} parent=1 // pred_fallthru
      _
    // Predicated region
    $region18: #{tpu_custom_call.1} parent=1 // pred_check
      _
    $region19: #{tpu_custom_call.1} parent=1 // pred_check_branch
      %42 = sbr.rel (0) target = $region21
    $region20: #{tpu_custom_call.1} parent=1 // pred_region
      _
    $region21: #{tpu_custom_call.1} parent=1 // pred_fallthru
      _
    // Predicated region
    $region22: #{tpu_custom_call.1} parent=1 // pred_check
      _
    $region23: #{tpu_custom_call.1} parent=1 // pred_check_branch
      %44 = sbr.rel (0) target = $region25
    $region24: #{tpu_custom_call.1} parent=1 // pred_region
      %45 = dma.done [#allocation3], 256
    $region25: #{tpu_custom_call.1} parent=1 // pred_fallthru
      _
    // Predicated region
    $region26: #{tpu_custom_call.1} parent=1 // pred_check
      _
    $region27: #{tpu_custom_call.1} parent=1 // pred_check_branch
      %47 = sbr.rel (0) target = $region29
    $region28: #{tpu_custom_call.1} parent=1 // pred_region
      %48 = dma.done [#allocation6], 2048
    $region29: #{tpu_custom_call.1} parent=1 // pred_fallthru
      _
    %v49 = vld [vmem:[#allocation2] sm:$0xff]
    %v50 = vld [vmem:[#allocation2 + $0x8] sm:$0xff]
    %v51 = vld [vmem:[#allocation5] sm:$0xff]
    %v52 = vld [vmem:[#allocation5 + $0x8] sm:$0xff]
    %v53 = vld [vmem:[#allocation5 + $0x10] sm:$0xff]
    %v54 = vld [vmem:[#allocation5 + $0x18] sm:$0xff]
    %v55 = vld [vmem:[#allocation5 + $0x20] sm:$0xff]
    %v56 = vld [vmem:[#allocation5 + $0x28] sm:$0xff]
    %v57 = vld [vmem:[#allocation5 + $0x30] sm:$0xff]
    %v58 = vld [vmem:[#allocation5 + $0x38] sm:$0xff]
    %v59 = vld [vmem:[#allocation5 + $0x40] sm:$0xff]
    %v60 = vld [vmem:[#allocation5 + $0x48] sm:$0xff]
    %v61 = vld [vmem:[#allocation5 + $0x50] sm:$0xff]
    %v62 = vld [vmem:[#allocation5 + $0x58] sm:$0xff]
    %v63 = vld [vmem:[#allocation5 + $0x60] sm:$0xff]
    %v64 = vld [vmem:[#allocation5 + $0x68] sm:$0xff]
    %v65 = vld [vmem:[#allocation5 + $0x70] sm:$0xff]
    %v66 = vld [vmem:[#allocation5 + $0x78] sm:$0xff]
    %67 = vmatprep.subr.mxu0 0.0
    %68 = vmatpush1.msra.mxu0 %v66
    %69 = vmatprep.subr.mxu0 0.0
    %70 = vmatpush1.msra.mxu0 %v65
    %71 = vmatprep.subr.mxu0 0.0
    %72 = vmatpush1.msra.mxu0 %v64
    %73 = vmatprep.subr.mxu0 0.0
    %74 = vmatpush1.msra.mxu0 %v63
    %75 = vmatprep.subr.mxu0 0.0
    %76 = vmatpush1.msra.mxu0 %v62
    %77 = vmatprep.subr.mxu0 0.0
    %78 = vmatpush1.msra.mxu0 %v61
    %79 = vmatprep.subr.mxu0 0.0
    %80 = vmatpush1.msra.mxu0 %v60
    %81 = vmatprep.subr.mxu0 0.0
    %82 = vmatpush1.msra.mxu0 %v59
    %83 = vmatprep.subr.mxu0 0.0
    %84 = vmatpush1.msra.mxu0 %v58
    %85 = vmatprep.subr.mxu0 0.0
    %86 = vmatpush1.msra.mxu0 %v57
    %87 = vmatprep.subr.mxu0 0.0
    %88 = vmatpush1.msra.mxu0 %v56
    %89 = vmatprep.subr.mxu0 0.0
    %90 = vmatpush1.msra.mxu0 %v55
    %91 = vmatprep.subr.mxu0 0.0
    %92 = vmatpush1.msra.mxu0 %v54
    %93 = vmatprep.subr.mxu0 0.0
    %94 = vmatpush1.msra.mxu0 %v53
    %95 = vmatprep.subr.mxu0 0.0
    %96 = vmatpush1.msra.mxu0 %v52
    %97 = vmatprep.subr.mxu0 0.0
    %98 = vmatpush1.msra.mxu0 %v51
    %99 = vmatprep.subr.mxu0 0.0
    %100 = vmatpush2.msra.mxu0 0.0
    %101 = vmatprep.subr.mxu0 0.0
    %102 = vmatpush2.msra.mxu0 0.0
    %103 = vmatprep.subr.mxu0 0.0
    %104 = vmatpush2.msra.mxu0 0.0
    %105 = vmatprep.subr.mxu0 0.0
    %106 = vmatpush2.msra.mxu0 0.0
    %107 = vmatprep.subr.mxu0 0.0
    %108 = vmatpush2.msra.mxu0 0.0
    %109 = vmatprep.subr.mxu0 0.0
    %110 = vmatpush2.msra.mxu0 0.0
    %111 = vmatprep.subr.mxu0 0.0
    %112 = vmatpush2.msra.mxu0 0.0
    %113 = vmatprep.subr.mxu0 0.0
    %114 = vmatpush2.msra.mxu0 0.0
    %115 = vmatprep.subr.mxu0 0.0
    %116 = vmatpush2.msra.mxu0 0.0
    %117 = vmatprep.subr.mxu0 0.0
    %118 = vmatpush2.msra.mxu0 0.0
    %119 = vmatprep.subr.mxu0 0.0
    %120 = vmatpush2.msra.mxu0 0.0
    %121 = vmatprep.subr.mxu0 0.0
    %122 = vmatpush2.msra.mxu0 0.0
    %123 = vmatprep.subr.mxu0 0.0
    %124 = vmatpush2.msra.mxu0 0.0
    %125 = vmatprep.subr.mxu0 0.0
    %126 = vmatpush2.msra.mxu0 0.0
    %127 = vmatprep.subr.mxu0 0.0
    %128 = vmatpush2.msra.mxu0 0.0
    %129 = vmatprep.subr.mxu0 0.0
    %130 = vmatpush2.msra.mxu0 0.0
    %131 = vmatprep.mubr.f32.mxu0 0.0
    %132 = vmatmul.mubr.f32.gmra.mxu0 %v49
    %v133 = vpop.f32.mrf.mxu0
    %v134 = vadd.f32 0.0, %v133
    %v135 = vpop.f32.mrf.mxu0
    %136 = vmatprep.mubr.f32.mxu0 0.0
    %137 = vmatmul.mubr.f32.gmra.mxu0 %v50
    %v138 = vpop.f32.mrf.mxu0
    %v139 = vadd.f32 0.0, %v138
    %v140 = vpop.f32.mrf.mxu0
    %141 = vdwg.mxu0
    %v142 = vadd.f32 %v49, %v134
    %v143 = vadd.f32 %v50, %v139
    %v144 = vld [vmem:[%s2] sm:$0x1]
    %v146 = vlaneseq
    %v147 = vshrl.u32 %v146, 7
    %v148 = vsub.s32 0, %v147
    %v149 = vrot.slane %v144, %v148
    %v151 = vadd.f32 %v142, %v149
    %v152 = vadd.f32 %v143, %v149
    %153 = vadd.xlane.f32.xlu0 %v151
    %v154 = vpop.xlane.xlu0 %153
    %155 = vadd.xlane.f32.xlu0 %v152
    %v156 = vpop.xlane.xlu0 %155
    %v157 = vmul.f32 %v151, %v151
    %v158 = vmul.f32 %v152, %v152
    %159 = vadd.xlane.f32.xlu0 %v157
    %v160 = vpop.xlane.xlu0 %159
    %161 = vadd.xlane.f32.xlu0 %v158
    %v162 = vpop.xlane.xlu0 %161
    %v163 = vmul.f32 %v154, 0.03125
    %v164 = vmul.f32 %v156, 0.03125
    %v165 = vmul.f32 %v160, 0.03125
    %v166 = vmul.f32 %v162, 0.03125
    %v167 = vmul.f32 %v163, %v163
    %v168 = vmul.f32 %v164, %v164
    %v169 = vsub.f32 %v165, %v167
    %v170 = vsub.f32 %v166, %v168
    %v171 = vmax.f32 %v169, 0.0
    %v172 = vmax.f32 %v170, 0.0
    %v173 = vadd.f32 %v171, 1e-05
    %v174 = vadd.f32 %v172, 1e-05
    %v175 = vrsqrt.pop %v173
    %v176 = vrsqrt.pop %v174
    %v177 = vsub.f32 %v151, %v163
    %v178 = vsub.f32 %v152, %v164
    %v179 = vmul.f32 %v177, %v175
    %v180 = vmul.f32 %v178, %v176
    %v181 = vld [vmem:[%s3] sm:$0x1]
    %v183 = vlaneseq
    %v184 = vshrl.u32 %v183, 7
    %v185 = vsub.s32 0, %v184
    %v186 = vrot.slane %v181, %v185
    %v188 = vmul.f32 %v179, %v186
    %v189 = vmul.f32 %v180, %v186
    %v190 = vld [vmem:[%s4] sm:$0x1]
    %v192 = vlaneseq
    %v193 = vshrl.u32 %v192, 7
    %v194 = vsub.s32 0, %v193
    %v195 = vrot.slane %v190, %v194
    %v197 = vadd.f32 %v188, %v195
    %v198 = vadd.f32 %v189, %v195
    %199 = vst [vmem:[#allocation7] sm:$0xff] %v197
    %200 = vst [vmem:[#allocation7 + $0x8] sm:$0xff] %v198
    // Predicated region
    $region30: #{tpu_custom_call.1} parent=1 // pred_check
      _
    $region31: #{tpu_custom_call.1} parent=1 // pred_check_branch
      %202 = sbr.rel (0) target = $region33
    $region32: #{tpu_custom_call.1} parent=1 // pred_region
      %s204 = ssub.s32 256, 256
      %205 = vsyncadd [#allocation4], %s204
      %s206 = sshll.u32 [#allocation7], 4
      %s207 = int_to_ptr.vmem [resolvable:$true] %s206
      %212 = dma.vmem_to_hbm [thread:$0]  %s207, 256, %s5, [#allocation4], 128, 128, 8
    $region33: #{tpu_custom_call.1} parent=1 // pred_fallthru
      _
    // Predicated region
    $region34: #{tpu_custom_call.1} parent=1 // pred_check
      _
    $region35: #{tpu_custom_call.1} parent=1 // pred_check_branch
      %214 = sbr.rel (0) target = $region37
    $region36: #{tpu_custom_call.1} parent=1 // pred_region
      %215 = dma.done [#allocation4], 256
    $region37: #{tpu_custom_call.1} parent=1 // pred_fallthru
      _
    %216 = vsyncpa [#allocation3], 1
    %217 = vsyncpa [#allocation6], 1
    %218 = vsyncpa [#allocation4], 1

</llo_original>
